<compile_context>
chip_gen: v7x
topology: tpu7x:2x2x1
jax: 0.10.0
libtpu: 0.0.40
codegen_flags: <defaults>
</compile_context>

<pallas_src>
import functools
import math

import numpy as np
import jax
import jax.numpy as jnp
from jax import lax
from jax.experimental import pallas as pl
from jax.experimental.pallas import tpu as pltpu


def _round_up(x, m):
    return ((x + m - 1) // m) * m


def _default_vmem_limit_bytes():
    # Generation-aware VMEM cap: ~48 MiB on v7x (64 MiB/TC), ~96-100 MiB on v5e/v6e (128 MiB).
    try:
        cap = int(pltpu.get_tpu_info().vmem_capacity_bytes)
    except Exception:  # unknown platform / interpret mode
        cap = 128 * 1024 * 1024
    return min(100 * 1024 * 1024, (cap * 3) // 4)


def _sep_fiber_conv_kernel(eblk_start_ref, eblk_cnt_ref,    # SMEM scalar prefetch [num_nblk]
                           dst_ref,                          # VMEM [BE, 1] int32 (sorted dst, -1 pad)
                           xsrc_ref,                          # VMEM [BE, OCp] stream dtype, gathered x[src]
                           kk_ref,                            # VMEM [BE, OCp] stream dtype, spatial kernel values
                           fk_ref,                            # VMEM [OCp, PDp] mxu dtype, fused fiber matrix (1/O folded)
                           bias_ref,                          # VMEM [1, PDp] f32
                           out_ref,                           # VMEM [BN, PDp] f32
                           x1_ref,                            # VMEM scratch [BN, OCp] f32 accumulator
                           nid_ref,                           # VMEM scratch [1, BN] int32 (node ids of this dst block)
                           *, block_n, block_e, mxu_dtype):
    i = pl.program_id(0)          # destination-node block
    j = pl.program_id(1)          # edge-block window position within this dst block

    @pl.when(j == 0)
    def _init():
        x1_ref[...] = jnp.zeros_like(x1_ref)
        nid_ref[...] = (lax.broadcasted_iota(jnp.int32, (1, block_n), 1)
                        + i * block_n)

    # Only edge blocks that actually overlap this destination block contribute.
    @pl.when(j < eblk_cnt_ref[i])
    def _accumulate():
        # message = x[src] * K(edge): f32 multiply on the VPU (v5e-safe), then cast to the
        # MXU operand dtype (bf16 by default, exact f32 accumulation below).
        msg = (xsrc_ref[...].astype(jnp.float32)
               * kk_ref[...].astype(jnp.float32)).astype(mxu_dtype)        # [BE, OCp]
        # segment-sum (scatter_add over dst) as one-hot selector matmul on the MXU:
        #   sel[e, n] = (dst[e] == i*BN + n);   x1 += sel^T @ msg
        # padded edges (dst = -1) and edges of neighbouring dst blocks select nothing,
        # so overlapping edge-block windows never double count.
        node_ids = jnp.broadcast_to(nid_ref[...], (block_e, block_n))      # [BE, BN]
        sel = (dst_ref[...] == node_ids).astype(mxu_dtype)                 # exact 0/1 in bf16
        x1_ref[...] += lax.dot_general(
            sel, msg,
            dimension_numbers=(((0,), (0,)), ((), ())),                    # sel^T @ msg
            preferred_element_type=jnp.float32)                            # [BN, OCp] f32 acc

    @pl.when(j == pl.num_programs(1) - 1)
    def _finalize():
        # x2[n, p*D+d] = sum_{o,c} x1[n, o*C+c] * fk[(o*C+c),(p*D+d)] + bias[d]
        # (the 1/O normalization is folded into fk on the host)
        x2 = jnp.dot(x1_ref[...].astype(mxu_dtype), fk_ref[...],
                     preferred_element_type=jnp.float32)
        out_ref[...] = x2 + bias_ref[...]


def separable_fiber_bundle_conv(x, kernel_basis, fiber_kernel_basis, edge_index,
                                w_kernel, w_fiber, bias,
                                n_out=None, block_n=128, block_e=512,
                                use_bf16=True):
    """Forward of SeparableFiberBundleConv (groups=1, attention=False, bias=True)."""
    N, O, C = x.shape
    E = edge_index.shape[1]
    P = fiber_kernel_basis.shape[0]
    D = w_fiber.shape[0] // C                  # out_channels
    OC, PD = O * C, P * D

    if isinstance(edge_index, jax.core.Tracer):
        raise ValueError("edge_index must be concrete (host-side CSR preprocessing); "
                         "do not jit-trace it — pass it as a static/host array.")

    stream_dt = jnp.bfloat16 if use_bf16 else jnp.float32   # HBM-streamed E*OC arrays
    mxu_dt = jnp.bfloat16 if use_bf16 else jnp.float32      # MXU operand dtype
    f32 = jnp.float32

    # ---- host-side graph preprocessing: sort edges by destination (race-free blocks) ----
    src_np = np.asarray(edge_index[0]).astype(np.int32)
    dst_np = np.asarray(edge_index[1]).astype(np.int32)
    if n_out is None:
        n_out = int(dst_np.max()) + 1          # PyTorch: dim_size = edge_index[1].max()+1

    order = np.argsort(dst_np, kind="stable")
    src_s = src_np[order]
    dst_s = dst_np[order]

    # block sizes (sublane aligned; edge blocks 16-aligned for bf16 packing), clamped to problem size
    block_n = _round_up(min(block_n, _round_up(n_out, 8)), 8)
    block_e = _round_up(min(block_e, _round_up(E, 16)), 16)
    n_out_pad = _round_up(n_out, block_n)
    e_pad = _round_up(E, block_e)
    num_nblk = n_out_pad // block_n
    num_eblk = e_pad // block_e

    # per-destination-block contiguous edge-block window (CSR row pointers -> block ranges)
    lo = np.searchsorted(dst_s, np.arange(num_nblk) * block_n, side="left")
    hi = np.searchsorted(dst_s, (np.arange(num_nblk) + 1) * block_n, side="left")
    has_edges = hi > lo
    eblk_start = np.where(has_edges, lo // block_e, 0).astype(np.int32)
    eblk_cnt = np.where(has_edges, (hi - 1) // block_e - lo // block_e + 1, 0).astype(np.int32)
    j_steps = max(1, int(eblk_cnt.max()))

    # ---- lane-dense flattening + padding (trailing dims -> multiples of 128) ----
    oc_pad = _round_up(OC, 128)
    pd_pad = _round_up(PD, 128)

    # spatial kernel linear K = kernel_basis @ W_k^T precomputed in XLA (C_in <= Kd,
    # halves the streamed HBM bytes); cast to the streaming dtype BEFORE the edge-order
    # gather/reorder so those materializations are also half-width.
    K = jnp.einsum("eok,ck->eoc", kernel_basis.astype(f32),
                   jnp.asarray(w_kernel, f32)).reshape(E, OC).astype(stream_dt)
    K_s = K[order]
    x_src = x.reshape(N, OC).astype(stream_dt)[src_s]     # gather x[src] in XLA (edge-sorted)

    def pad2(a, rows, cols):
        return jnp.pad(a, ((0, rows - a.shape[0]), (0, cols - a.shape[1])))

    x_src_p = pad2(x_src, e_pad, oc_pad)
    K_p = pad2(K_s, e_pad, oc_pad)
    dst_p = jnp.pad(jnp.asarray(dst_s, jnp.int32), (0, e_pad - E),
                    constant_values=-1).reshape(e_pad, 1)

    # fused fiber-kernel matrix with the 1/O normalization folded in:
    #   fk_mat[(o*C+c), (p*D+d)] = (1/O) * (fkb @ W_f^T)[p, o, d, c]
    fk4 = jnp.einsum("pok,nk->pon", fiber_kernel_basis.astype(f32),
                     jnp.asarray(w_fiber, f32)).reshape(P, O, D, C)
    fk_mat = pad2((jnp.transpose(fk4, (1, 3, 0, 2)).reshape(OC, PD)
                   * (1.0 / O)).astype(mxu_dt), oc_pad, pd_pad)

    bias_flat = jnp.tile(jnp.asarray(bias, f32), (P,))              # index p*D+d -> bias[d]
    bias_p = jnp.pad(bias_flat, (0, pd_pad - PD)).reshape(1, pd_pad)

    # ---- pallas_call: grid = (dst blocks [parallel], edge-block window [arbitrary]) ----
    def edge_map(i, j, eblk_start, eblk_cnt):
        # Clamp to this dst block's OWN last edge-block window: when j exceeds the
        # block's window the block index stops advancing, so skipped steps issue no DMA.
        last = eblk_start[i] + jnp.maximum(eblk_cnt[i] - 1, 0)
        return (jnp.minimum(eblk_start[i] + j, last), 0)

    kernel = functools.partial(_sep_fiber_conv_kernel,
                               block_n=block_n, block_e=block_e, mxu_dtype=mxu_dt)

    out = pl.pallas_call(
        kernel,
        out_shape=jax.ShapeDtypeStruct((n_out_pad, pd_pad), jnp.float32),
        grid_spec=pltpu.PrefetchScalarGridSpec(
            num_scalar_prefetch=2,
            grid=(num_nblk, j_steps),
            in_specs=[
                pl.BlockSpec((block_e, 1), edge_map),                       # dst (sorted, -1 pad)
                pl.BlockSpec((block_e, oc_pad), edge_map),                  # x[src] (stream dtype)
                pl.BlockSpec((block_e, oc_pad), edge_map),                  # spatial kernel (stream dtype)
                pl.BlockSpec((oc_pad, pd_pad), lambda i, j, *_: (0, 0)),    # fk_mat (resident)
                pl.BlockSpec((1, pd_pad), lambda i, j, *_: (0, 0)),         # bias
            ],
            out_specs=pl.BlockSpec((block_n, pd_pad), lambda i, j, *_: (i, 0)),
            scratch_shapes=[pltpu.VMEM((block_n, oc_pad), jnp.float32),     # x1 accumulator
                            pltpu.VMEM((1, block_n), jnp.int32)],           # node-id row
        ),
        compiler_params=pltpu.CompilerParams(
            dimension_semantics=("parallel", "arbitrary"),
            vmem_limit_bytes=_default_vmem_limit_bytes()),
    )(jnp.asarray(eblk_start), jnp.asarray(eblk_cnt),
      dst_p, x_src_p, K_p, fk_mat, bias_p)

    return out[:n_out, :PD].reshape(n_out, P, D)


def _reference(x, kernel_basis, fiber_kernel_basis, edge_index, w_kernel, w_fiber, bias):
    """Pure-numpy reference mirroring the PyTorch forward (groups=1, no attention)."""
    x = np.asarray(x, np.float64)
    kb = np.asarray(kernel_basis, np.float64)
    fkb = np.asarray(fiber_kernel_basis, np.float64)
    wk = np.asarray(w_kernel, np.float64)
    wf = np.asarray(w_fiber, np.float64)
    b = np.asarray(bias, np.float64)
    src = np.asarray(edge_index[0])
    dst = np.asarray(edge_index[1])
    K = kb @ wk.T                                              # [E, O, C]
    message = x[src] * K
    n_out = int(dst.max()) + 1
    x1 = np.zeros((n_out,) + x.shape[1:], np.float64)
    np.add.at(x1, dst, message)
    fk = fkb @ wf.T                                            # [P, O, D*C]
    C = x.shape[2]
    D = wf.shape[0] // C
    fk4 = fk.reshape(fk.shape[0], fk.shape[1], D, C)
    x2 = np.einsum('boc,podc->bpd', x1, fk4) / fk.shape[-2]
    return x2 + b


if __name__ == "__main__":
    N, O, C_in, C_out, Kd, E, P = 24, 8, 8, 16, 16, 96, 8

    key = jax.random.PRNGKey(0)
    kx, kkb, kfkb, ksrc, kdst, kwk, kwf, kb = jax.random.split(key, 8)

    x = jax.random.normal(kx, (N, O, C_in), jnp.float32)
    kernel_basis = jax.random.normal(kkb, (E, O, Kd), jnp.float32)
    fiber_kernel_basis = jax.random.normal(kfkb, (P, O, Kd), jnp.float32)
    src = jax.random.randint(ksrc, (E,), 0, N, jnp.int32)
    dst = jax.random.randint(kdst, (E,), 0, N, jnp.int32)
    edge_index = jnp.stack([src, dst], axis=0)

    # nn.Linear-like deterministic init; non-zero bias so the bias path is validated
    w_kernel = jax.random.normal(kwk, (C_in, Kd), jnp.float32) / math.sqrt(Kd)
    w_fiber = jax.random.normal(kwf, (C_out * C_in, Kd), jnp.float32) / math.sqrt(Kd)
    bias = 0.5 * jax.random.normal(kb, (C_out,), jnp.float32)

    ref = _reference(x, kernel_basis, fiber_kernel_basis, edge_index,
                     w_kernel, w_fiber, bias)

    # small block sizes so the test exercises multiple dst blocks and edge-block windows

    # 1) exact all-f32 path — tight tolerance, validates the structural changes
    out_f32 = separable_fiber_bundle_conv(x, kernel_basis, fiber_kernel_basis,
                                          edge_index, w_kernel, w_fiber, bias,
                                          block_n=8, block_e=32, use_bf16=False)
    out_f32 = np.asarray(jax.block_until_ready(out_f32))
    assert out_f32.shape == ref.shape, (out_f32.shape, ref.shape)
    if not np.allclose(out_f32, ref, rtol=1e-3, atol=1e-3):
        raise AssertionError(
            f"f32 mismatch: max abs err = {np.max(np.abs(out_f32 - ref))}")

    # 2) default optimized path: bf16 streaming + bf16 MXU operands, f32 accumulation
    out_bf16 = separable_fiber_bundle_conv(x, kernel_basis, fiber_kernel_basis,
                                           edge_index, w_kernel, w_fiber, bias,
                                           block_n=8, block_e=32, use_bf16=True)
    out_bf16 = np.asarray(jax.block_until_ready(out_bf16))
    assert out_bf16.shape == ref.shape, (out_bf16.shape, ref.shape)
    if not np.allclose(out_bf16, ref, rtol=3e-2, atol=5e-2):
        raise AssertionError(
            f"bf16 mismatch: max abs err = {np.max(np.abs(out_bf16 - ref))}")

    print("KERNEL_OK")
</pallas_src>

<mosaic_0001>
module attributes {stable_mosaic.version = 11 : i64} {
  func.func @_sep_fiber_conv_kernel(%arg0: i32, %arg1: i32, %arg2: memref<3xi32, #tpu.memory_space<smem>>, %arg3: memref<3xi32, #tpu.memory_space<smem>>, %arg4: memref<32x1xi32, #tpu.memory_space<vmem>>, %arg5: memref<32x128xf32, #tpu.memory_space<vmem>>, %arg6: memref<32x128xf32, #tpu.memory_space<vmem>>, %arg7: memref<128x128xf32, #tpu.memory_space<vmem>>, %arg8: memref<1x128xf32, #tpu.memory_space<vmem>>, %arg9: memref<8x128xf32, #tpu.memory_space<vmem>>, %arg10: memref<8x128xf32, #tpu.memory_space<vmem>>, %arg11: memref<1x8xi32, #tpu.memory_space<vmem>>) attributes {dimension_semantics = [#tpu.dimension_semantics<parallel>, #tpu.dimension_semantics<arbitrary>], iteration_bounds = array<i64: 3, 2>, scalar_prefetch = 2 : i64, scratch_operands = 2 : i64, tpu.core_type = #tpu.core_type<tc>, window_params = [{transform_indices = @transform_0, window_bounds = array<i64: 32, 1>}, {transform_indices = @transform_1, window_bounds = array<i64: 32, 128>}, {transform_indices = @transform_2, window_bounds = array<i64: 32, 128>}, {pipeline_mode = #tpu.pipeline_mode<synchronous>, transform_indices = @transform_3, window_bounds = array<i64: 128, 128>}, {pipeline_mode = #tpu.pipeline_mode<synchronous>, transform_indices = @transform_4, window_bounds = array<i64: 1, 128>}, {transform_indices = @transform_5, window_bounds = array<i64: 8, 128>}]} {
    %c0_i32 = arith.constant 0 : i32
    %0 = arith.cmpi eq, %arg1, %c0_i32 : i32
    %1 = arith.extui %0 : i1 to i32
    %c0_i32_0 = arith.constant 0 : i32
    %2 = arith.cmpi ne, %1, %c0_i32_0 : i32
    scf.if %2 {
      %cst = arith.constant 0.000000e+00 : f32
      %11 = vector.broadcast %cst : f32 to vector<8x128xf32>
      %c0 = arith.constant 0 : index
      %c0_3 = arith.constant 0 : index
      %12 = vector.load %arg10[%c0, %c0_3] : memref<8x128xf32, #tpu.memory_space<vmem>>, vector<8x128xf32>
      tpu.vector_store %arg10[%c0, %c0_3], %11 {strides = array<i32>} : memref<8x128xf32, #tpu.memory_space<vmem>>, vector<8x128xf32>,
      %13 = tpu.iota {dimensions = array<i32: 1>} : vector<1x8xi32>
      %c8_i32 = arith.constant 8 : i32
      %14 = arith.muli %arg0, %c8_i32 : i32
      %15 = vector.broadcast %14 : i32 to vector<1x8xi32>
      %16 = arith.addi %13, %15 : vector<1x8xi32>
      %c0_4 = arith.constant 0 : index
      %c0_5 = arith.constant 0 : index
      %17 = vector.load %arg11[%c0_4, %c0_5] : memref<1x8xi32, #tpu.memory_space<vmem>>, vector<1x8xi32>
      tpu.vector_store %arg11[%c0_4, %c0_5], %16 {strides = array<i32>} : memref<1x8xi32, #tpu.memory_space<vmem>>, vector<1x8xi32>,
    } else {
    }
    %3 = arith.index_cast %arg0 : i32 to index
    %4 = memref.load %arg3[%3] : memref<3xi32, #tpu.memory_space<smem>>
    %5 = arith.cmpi slt, %arg1, %4 : i32
    %6 = arith.extui %5 : i1 to i32
    %c0_i32_1 = arith.constant 0 : i32
    %7 = arith.cmpi ne, %6, %c0_i32_1 : i32
    scf.if %7 {
      %c0 = arith.constant 0 : index
      %c0_3 = arith.constant 0 : index
      %11 = vector.load %arg5[%c0, %c0_3] : memref<32x128xf32, #tpu.memory_space<vmem>>, vector<32x128xf32>
      %c0_4 = arith.constant 0 : index
      %c0_5 = arith.constant 0 : index
      %12 = vector.load %arg6[%c0_4, %c0_5] : memref<32x128xf32, #tpu.memory_space<vmem>>, vector<32x128xf32>
      %13 = arith.mulf %11, %12 : vector<32x128xf32>
      %c0_6 = arith.constant 0 : index
      %c0_7 = arith.constant 0 : index
      %14 = vector.load %arg11[%c0_6, %c0_7] : memref<1x8xi32, #tpu.memory_space<vmem>>, vector<1x8xi32>
      %15 = vector.shape_cast %14 : vector<1x8xi32> to vector<1x8xi32>
      %16 = vector.broadcast %15 : vector<1x8xi32> to vector<32x8xi32>
      %c0_8 = arith.constant 0 : index
      %c0_9 = arith.constant 0 : index
      %17 = vector.load %arg4[%c0_8, %c0_9] : memref<32x1xi32, #tpu.memory_space<vmem>>, vector<32x1xi32>
      %18 = vector.broadcast %17 : vector<32x1xi32> to vector<32x8xi32>
      %19 = arith.cmpi eq, %18, %16 : vector<32x8xi32>
      %20 = arith.extui %19 : vector<32x8xi1> to vector<32x8xi32>
      %21 = arith.sitofp %20 : vector<32x8xi32> to vector<32x8xf32>
      %c0_10 = arith.constant 0 : index
      %c0_11 = arith.constant 0 : index
      %22 = vector.load %arg10[%c0_10, %c0_11] : memref<8x128xf32, #tpu.memory_space<vmem>>, vector<8x128xf32>
      %cst = arith.constant dense<0.000000e+00> : vector<8x128xf32>
      %23 = tpu.matmul %21, %13, %cst {dimension_numbers = #tpu.dot_dimension_numbers<[0], [0], [1], [1], [0, 1, 1, 1], [], []>} : vector<32x8xf32>, vector<32x128xf32>, vector<8x128xf32> -> vector<8x128xf32>
      %24 = arith.addf %22, %23 : vector<8x128xf32>
      %c0_12 = arith.constant 0 : index
      %c0_13 = arith.constant 0 : index
      %25 = vector.load %arg10[%c0_12, %c0_13] : memref<8x128xf32, #tpu.memory_space<vmem>>, vector<8x128xf32>
      tpu.vector_store %arg10[%c0_12, %c0_13], %24 {strides = array<i32>} : memref<8x128xf32, #tpu.memory_space<vmem>>, vector<8x128xf32>,
    } else {
    }
    %c1_i32 = arith.constant 1 : i32
    %8 = arith.cmpi eq, %arg1, %c1_i32 : i32
    %9 = arith.extui %8 : i1 to i32
    %c0_i32_2 = arith.constant 0 : i32
    %10 = arith.cmpi ne, %9, %c0_i32_2 : i32
    scf.if %10 {
      %c0 = arith.constant 0 : index
      %c0_3 = arith.constant 0 : index
      %11 = vector.load %arg10[%c0, %c0_3] : memref<8x128xf32, #tpu.memory_space<vmem>>, vector<8x128xf32>
      %c0_4 = arith.constant 0 : index
      %c0_5 = arith.constant 0 : index
      %12 = vector.load %arg7[%c0_4, %c0_5] : memref<128x128xf32, #tpu.memory_space<vmem>>, vector<128x128xf32>
      %cst = arith.constant dense<0.000000e+00> : vector<8x128xf32>
      %13 = tpu.matmul %11, %12, %cst {dimension_numbers = #tpu.dot_dimension_numbers<[1], [0], [0], [1], [0, 0, 1, 1], [], []>} : vector<8x128xf32>, vector<128x128xf32>, vector<8x128xf32> -> vector<8x128xf32>
      %c0_6 = arith.constant 0 : index
      %c0_7 = arith.constant 0 : index
      %14 = vector.load %arg8[%c0_6, %c0_7] : memref<1x128xf32, #tpu.memory_space<vmem>>, vector<1x128xf32>
      %15 = vector.broadcast %14 : vector<1x128xf32> to vector<8x128xf32>
      %16 = arith.addf %13, %15 : vector<8x128xf32>
      %c0_8 = arith.constant 0 : index
      %c0_9 = arith.constant 0 : index
      %17 = vector.load %arg9[%c0_8, %c0_9] : memref<8x128xf32, #tpu.memory_space<vmem>>, vector<8x128xf32>
      tpu.vector_store %arg9[%c0_8, %c0_9], %16 {strides = array<i32>} : memref<8x128xf32, #tpu.memory_space<vmem>>, vector<8x128xf32>,
    } else {
    }
    return
  }
  func.func @transform_0(%arg0: i32, %arg1: i32, %arg2: memref<3xi32, #tpu.memory_space<smem>>, %arg3: memref<3xi32, #tpu.memory_space<smem>>) -> (i32, i32) {
    %0 = arith.index_cast %arg0 : i32 to index
    %1 = memref.load %arg2[%0] : memref<3xi32, #tpu.memory_space<smem>>
    %2 = arith.index_cast %arg0 : i32 to index
    %3 = memref.load %arg3[%2] : memref<3xi32, #tpu.memory_space<smem>>
    %c1_i32 = arith.constant 1 : i32
    %4 = arith.subi %3, %c1_i32 : i32
    %c0_i32 = arith.constant 0 : i32
    %5 = arith.maxsi %4, %c0_i32 : i32
    %6 = arith.addi %1, %5 : i32
    %7 = arith.index_cast %arg0 : i32 to index
    %8 = memref.load %arg2[%7] : memref<3xi32, #tpu.memory_space<smem>>
    %9 = arith.addi %8, %arg1 : i32
    %10 = arith.minsi %9, %6 : i32
    %c0_i32_0 = arith.constant 0 : i32
    %c0_i32_1 = arith.constant 0 : i32
    return %10, %c0_i32_0 : i32, i32
  }
  func.func @transform_1(%arg0: i32, %arg1: i32, %arg2: memref<3xi32, #tpu.memory_space<smem>>, %arg3: memref<3xi32, #tpu.memory_space<smem>>) -> (i32, i32) {
    %0 = arith.index_cast %arg0 : i32 to index
    %1 = memref.load %arg2[%0] : memref<3xi32, #tpu.memory_space<smem>>
    %2 = arith.index_cast %arg0 : i32 to index
    %3 = memref.load %arg3[%2] : memref<3xi32, #tpu.memory_space<smem>>
    %c1_i32 = arith.constant 1 : i32
    %4 = arith.subi %3, %c1_i32 : i32
    %c0_i32 = arith.constant 0 : i32
    %5 = arith.maxsi %4, %c0_i32 : i32
    %6 = arith.addi %1, %5 : i32
    %7 = arith.index_cast %arg0 : i32 to index
    %8 = memref.load %arg2[%7] : memref<3xi32, #tpu.memory_space<smem>>
    %9 = arith.addi %8, %arg1 : i32
    %10 = arith.minsi %9, %6 : i32
    %c0_i32_0 = arith.constant 0 : i32
    %c0_i32_1 = arith.constant 0 : i32
    return %10, %c0_i32_0 : i32, i32
  }
  func.func @transform_2(%arg0: i32, %arg1: i32, %arg2: memref<3xi32, #tpu.memory_space<smem>>, %arg3: memref<3xi32, #tpu.memory_space<smem>>) -> (i32, i32) {
    %0 = arith.index_cast %arg0 : i32 to index
    %1 = memref.load %arg2[%0] : memref<3xi32, #tpu.memory_space<smem>>
    %2 = arith.index_cast %arg0 : i32 to index
    %3 = memref.load %arg3[%2] : memref<3xi32, #tpu.memory_space<smem>>
    %c1_i32 = arith.constant 1 : i32
    %4 = arith.subi %3, %c1_i32 : i32
    %c0_i32 = arith.constant 0 : i32
    %5 = arith.maxsi %4, %c0_i32 : i32
    %6 = arith.addi %1, %5 : i32
    %7 = arith.index_cast %arg0 : i32 to index
    %8 = memref.load %arg2[%7] : memref<3xi32, #tpu.memory_space<smem>>
    %9 = arith.addi %8, %arg1 : i32
    %10 = arith.minsi %9, %6 : i32
    %c0_i32_0 = arith.constant 0 : i32
    %c0_i32_1 = arith.constant 0 : i32
    return %10, %c0_i32_0 : i32, i32
  }
  func.func @transform_3(%arg0: i32, %arg1: i32, %arg2: memref<3xi32, #tpu.memory_space<smem>>, %arg3: memref<3xi32, #tpu.memory_space<smem>>) -> (i32, i32) {
    %c0_i32 = arith.constant 0 : i32
    %c0_i32_0 = arith.constant 0 : i32
    %c0_i32_1 = arith.constant 0 : i32
    return %c0_i32, %c0_i32_0 : i32, i32
  }
  func.func @transform_4(%arg0: i32, %arg1: i32, %arg2: memref<3xi32, #tpu.memory_space<smem>>, %arg3: memref<3xi32, #tpu.memory_space<smem>>) -> (i32, i32) {
    %c0_i32 = arith.constant 0 : i32
    %c0_i32_0 = arith.constant 0 : i32
    %c0_i32_1 = arith.constant 0 : i32
    return %c0_i32, %c0_i32_0 : i32, i32
  }
  func.func @transform_5(%arg0: i32, %arg1: i32, %arg2: memref<3xi32, #tpu.memory_space<smem>>, %arg3: memref<3xi32, #tpu.memory_space<smem>>) -> (i32, i32) {
    %c0_i32 = arith.constant 0 : i32
    %c0_i32_0 = arith.constant 0 : i32
    return %arg0, %c0_i32 : i32, i32
  }
}

</mosaic_0001>

<llo_original>
// kernel: tpu_custom_call.1
$region0: #{tpu_custom_call.1}
  #allocation0 [shape = 'u32[]', space=smem, size = 0x4, offset = 0x4, fixed_abs, tag = 'smem constant byte address 0x4 - core index']
  #allocation1 [shape = 'u32[144,128]{1,0:T(1,128)}', space=vmem, size = 0x12000, scoped, tag = 'internal scratch']
  #allocation2 [shape = 'f32[8,128]{1,0:T(8,128)}', space=vmem, size = 0x1000, scoped, tag = 'scratch operand']
  #allocation3 [shape = 's32[1,8]{1,0:T(1,128)}', space=vmem, size = 0x200, scoped, tag = 'scratch operand']
  #allocation4 [shape = 's32[1]{0}', space=sflag, size = 0x4, scoped, tag = 'scoped memory for tpu_custom_call.1']
  #allocation5 [shape = 'u8[512]{0}', space=smem, size = 0x200, scoped, tag = 'prefetched SMEM operand 0']
  #allocation6 [shape = 'u8[512]{0}', space=smem, size = 0x200, scoped, tag = 'prefetched SMEM operand 1']
  %s0 = inlined_call_operand.hbm [shape: s32[3], index: 0, kind: input, shape index: {}]
  %s1 = inlined_call_operand.hbm [shape: s32[3], index: 1, kind: input, shape index: {}]
  %s2 = inlined_call_operand.hbm [shape: s32[96,1], index: 2, kind: input, shape index: {}]
  %s3 = inlined_call_operand.hbm [shape: f32[96,128], index: 3, kind: input, shape index: {}]
  %s4 = inlined_call_operand.hbm [shape: f32[96,128], index: 4, kind: input, shape index: {}]
  %s5 = inlined_call_operand.hbm [shape: f32[128,128], index: 5, kind: input, shape index: {}]
  %s6 = inlined_call_operand.hbm [shape: f32[1,128], index: 6, kind: input, shape index: {}]
  %s7 = inlined_call_operand.hbm [shape: f32[24,128], index: 7, kind: output, shape index: {}]
  %s8 = sld [smem:[#allocation0]]
  $region85: #{tpu_custom_call.1} parent=0
    _
  %s10 = ssub.s32 1, %s8
  %s11 = scalar_select 0, %s10, %s8
  %13 = dma.hbm_to_smem %s0, 16, [#allocation5], [#allocation4]
  %15 = dma.hbm_to_smem %s1, 16, [#allocation6], [#allocation4]
  %16 = dma.done [#allocation4], 32
  %17 = sfence
  $region1: #{tpu_custom_call.1} parent=0
    #allocation7 [shape = 'u8[32768]{0}', space=vmem, size = 0x8000, scoped, tag = 'input window, operand 2']
    #allocation8 [shape = 's32[2]{0}', space=sflag, size = 0x8, scoped, tag = 'scoped memory for tpu_custom_call.1']
    #allocation9 [shape = 's32[2]{0}', space=sflag, size = 0x8, scoped, tag = 'scoped memory for tpu_custom_call.1']
    #allocation10 [shape = 'u8[32768]{0}', space=vmem, size = 0x8000, scoped, tag = 'input window, operand 3']
    #allocation11 [shape = 's32[2]{0}', space=sflag, size = 0x8, scoped, tag = 'scoped memory for tpu_custom_call.1']
    #allocation12 [shape = 'u8[32768]{0}', space=vmem, size = 0x8000, scoped, tag = 'input window, operand 4']
    #allocation13 [shape = 'u8[65536]{0}', space=vmem, size = 0x10000, scoped, tag = 'input window, operand 5, single buffered']
    #allocation14 [shape = 's32[1]{0}', space=sflag, size = 0x4, scoped, tag = 'scoped memory for tpu_custom_call.1']
    #allocation15 [shape = 'u8[512]{0}', space=vmem, size = 0x400, scoped, tag = 'input window, operand 6, single buffered']
    #allocation16 [shape = 'u8[8192]{0}', space=vmem, size = 0x2000, scoped, tag = 'output window, operand 0']
    %18 = vsyncpa [#allocation8], 0
    %s19 = scalar_lea.sflag [#allocation8], 1
    %20 = vsyncpa %s19, 0
    %21 = vsyncpa [#allocation11], 0
    %s22 = scalar_lea.sflag [#allocation11], 1
    %23 = vsyncpa %s22, 0
    %24 = vsyncpa [#allocation14], 0
    %25 = vsyncpa [#allocation9], 0
    %s26 = scalar_lea.sflag [#allocation9], 1
    %27 = vsyncpa %s26, 0
    loop: start=0, step=1, limit=8
    $region2: #{tpu_custom_call.1} parent=1 // loop_pre_header
      _
    $region3: #{tpu_custom_call.1} parent=1 // loop_header
      %s29 = sphi 0, %s33
      %p30 = scmp.ge.s32.totalorder %s29, 8
      %s36 = sphi 0, %s48
      %s37 = sphi 0, %s44
      %s38 = sphi 0, %s36
      %s39 = sphi 0, %s37
      %s40 = sphi 0, %s38
      %s41 = sphi 0, %s39
      %s69 = sphi 0, %s71
      %s72 = sphi 0, %s69
      %s73 = sphi 0, %s72
      %s89 = sphi 0, %s73
      %s113 = sphi 0, %s115
      %s116 = sphi 0, %s113
      %s117 = sphi 0, %s116
      %s133 = sphi 0, %s117
      %s157 = sphi 0, %s159
      %s160 = sphi 0, %s157
      %s161 = sphi 0, %s160
      %s177 = sphi 0, %s161
      %s181 = sphi 0, %s181
      %s183 = sphi 0, %s181
      %s184 = sphi 0, %s183
      %s198 = sphi 0, %s184
      %s202 = sphi 0, %s202
      %s204 = sphi 0, %s202
      %s205 = sphi 0, %s204
      %s219 = sphi 0, %s205
      %s225 = sphi 0, %s227
      %s228 = sphi 0, %s225
      %s229 = sphi 0, %s228
      %s245 = sphi 0, %s229
    $region4: #{tpu_custom_call.1} parent=1 // loop_header_branch
      %32 = sbr.rel (%p30) target = $region8
    $region5: #{tpu_custom_call.1} parent=1 // loop_body
      %s34 = ssub.s32 %s29, 1
      %s35 = ssub.s32 %s29, 2
      %s42 = sadd.s32 1, %s37
      %p43 = scmp.ge.s32.totalorder %s42, 2
      %s44 = scalar_select %p43, 0, %s42
      %s45 = sadd.s32 1, %s36
      %s46 = scalar_select %p43, %s45, %s36
      %p47 = scmp.ge.s32.totalorder %s46, 3
      %s48 = scalar_select %p47, 0, %s46
      %s49 = sld [smem:[#allocation5 + %s36]]
      %s50 = sld [smem:[#allocation6 + %s36]]
      %s51 = ssub.s32 %s50, 1
      %p52 = scmp.gt.s32.totalorder %s51, 0
      %s53 = scalar_select %p52, %s51, 0
      %s54 = sadd.s32 %s49, %s53
      %s55 = sadd.s32 %s49, %s37
      %p56 = scmp.lt.s32.totalorder %s55, %s54
      %s57 = scalar_select %p56, %s55, %s54
      %s58 = sld [smem:[#allocation5 + %s48]]
      %s59 = sld [smem:[#allocation6 + %s48]]
      %s60 = ssub.s32 %s59, 1
      %p61 = scmp.gt.s32.totalorder %s60, 0
      %s62 = scalar_select %p61, %s60, 0
      %s63 = sadd.s32 %s58, %s62
      %s64 = sadd.s32 %s58, %s44
      %p65 = scmp.lt.s32.totalorder %s64, %s63
      %s66 = scalar_select %p65, %s64, %s63
      %s67 = ssub.s32 %s57, %s66
      %p68 = scmp.eq.s32.totalorder %s67, 0
      %s70 = sadd.s32 %s69, 1
      %s71 = scalar_select %p68, %s69, %s70
      %p74 = pneg %p68
      %p75 = scmp.eq.s32.totalorder %s29, 5
      %p76 = por %p74, %p75
      %p77 = scmp.ne.s32.totalorder %s69, %s72
      %p78 = scmp.eq.s32.totalorder %s29, 0
      %p79 = por %p77, %p78
      %p80 = scmp.ne.s32.totalorder %s69, %s72
      %p81 = scmp.eq.s32.totalorder %s34, 5
      %p82 = por %p80, %p81
      %p83 = scmp.ne.s32.totalorder %s72, %s73
      %p84 = scmp.eq.s32.totalorder %s34, 0
      %p85 = por %p83, %p84
      %p86 = scmp.ne.s32.totalorder %s72, %s73
      %p87 = scmp.eq.s32.totalorder %s35, 5
      %p88 = por %p86, %p87
      %p90 = scmp.ne.s32.totalorder %s73, %s89
      %p91 = scmp.eq.s32.totalorder %s35, 0
      %p92 = por %p90, %p91
      %s93 = sld [smem:[#allocation5 + %s36]]
      %s94 = sld [smem:[#allocation6 + %s36]]
      %s95 = ssub.s32 %s94, 1
      %p96 = scmp.gt.s32.totalorder %s95, 0
      %s97 = scalar_select %p96, %s95, 0
      %s98 = sadd.s32 %s93, %s97
      %s99 = sadd.s32 %s93, %s37
      %p100 = scmp.lt.s32.totalorder %s99, %s98
      %s101 = scalar_select %p100, %s99, %s98
      %s102 = sld [smem:[#allocation5 + %s48]]
      %s103 = sld [smem:[#allocation6 + %s48]]
      %s104 = ssub.s32 %s103, 1
      %p105 = scmp.gt.s32.totalorder %s104, 0
      %s106 = scalar_select %p105, %s104, 0
      %s107 = sadd.s32 %s102, %s106
      %s108 = sadd.s32 %s102, %s44
      %p109 = scmp.lt.s32.totalorder %s108, %s107
      %s110 = scalar_select %p109, %s108, %s107
      %s111 = ssub.s32 %s101, %s110
      %p112 = scmp.eq.s32.totalorder %s111, 0
      %s114 = sadd.s32 %s113, 1
      %s115 = scalar_select %p112, %s113, %s114
      %p118 = pneg %p112
      %p119 = scmp.eq.s32.totalorder %s29, 5
      %p120 = por %p118, %p119
      %p121 = scmp.ne.s32.totalorder %s113, %s116
      %p122 = scmp.eq.s32.totalorder %s29, 0
      %p123 = por %p121, %p122
      %p124 = scmp.ne.s32.totalorder %s113, %s116
      %p125 = scmp.eq.s32.totalorder %s34, 5
      %p126 = por %p124, %p125
      %p127 = scmp.ne.s32.totalorder %s116, %s117
      %p128 = scmp.eq.s32.totalorder %s34, 0
      %p129 = por %p127, %p128
      %p130 = scmp.ne.s32.totalorder %s116, %s117
      %p131 = scmp.eq.s32.totalorder %s35, 5
      %p132 = por %p130, %p131
      %p134 = scmp.ne.s32.totalorder %s117, %s133
      %p135 = scmp.eq.s32.totalorder %s35, 0
      %p136 = por %p134, %p135
      %s137 = sld [smem:[#allocation5 + %s36]]
      %s138 = sld [smem:[#allocation6 + %s36]]
      %s139 = ssub.s32 %s138, 1
      %p140 = scmp.gt.s32.totalorder %s139, 0
      %s141 = scalar_select %p140, %s139, 0
      %s142 = sadd.s32 %s137, %s141
      %s143 = sadd.s32 %s137, %s37
      %p144 = scmp.lt.s32.totalorder %s143, %s142
      %s145 = scalar_select %p144, %s143, %s142
      %s146 = sld [smem:[#allocation5 + %s48]]
      %s147 = sld [smem:[#allocation6 + %s48]]
      %s148 = ssub.s32 %s147, 1
      %p149 = scmp.gt.s32.totalorder %s148, 0
      %s150 = scalar_select %p149, %s148, 0
      %s151 = sadd.s32 %s146, %s150
      %s152 = sadd.s32 %s146, %s44
      %p153 = scmp.lt.s32.totalorder %s152, %s151
      %s154 = scalar_select %p153, %s152, %s151
      %s155 = ssub.s32 %s145, %s154
      %p156 = scmp.eq.s32.totalorder %s155, 0
      %s158 = sadd.s32 %s157, 1
      %s159 = scalar_select %p156, %s157, %s158
      %p162 = pneg %p156
      %p163 = scmp.eq.s32.totalorder %s29, 5
      %p164 = por %p162, %p163
      %p165 = scmp.ne.s32.totalorder %s157, %s160
      %p166 = scmp.eq.s32.totalorder %s29, 0
      %p167 = por %p165, %p166
      %p168 = scmp.ne.s32.totalorder %s157, %s160
      %p169 = scmp.eq.s32.totalorder %s34, 5
      %p170 = por %p168, %p169
      %p171 = scmp.ne.s32.totalorder %s160, %s161
      %p172 = scmp.eq.s32.totalorder %s34, 0
      %p173 = por %p171, %p172
      %p174 = scmp.ne.s32.totalorder %s160, %s161
      %p175 = scmp.eq.s32.totalorder %s35, 5
      %p176 = por %p174, %p175
      %p178 = scmp.ne.s32.totalorder %s161, %s177
      %p179 = scmp.eq.s32.totalorder %s35, 0
      %p180 = por %p178, %p179
      %s182 = sadd.s32 %s181, 1
      %p185 = scmp.eq.s32.totalorder %s29, 5
      %p186 = scmp.ne.s32.totalorder %s181, %s183
      %p187 = scmp.eq.s32.totalorder %s29, 0
      %p188 = por %p186, %p187
      %p189 = scmp.ne.s32.totalorder %s181, %s183
      %p190 = scmp.eq.s32.totalorder %s34, 5
      %p191 = por %p189, %p190
      %p192 = scmp.ne.s32.totalorder %s183, %s184
      %p193 = scmp.eq.s32.totalorder %s34, 0
      %p194 = por %p192, %p193
      %p195 = scmp.ne.s32.totalorder %s183, %s184
      %p196 = scmp.eq.s32.totalorder %s35, 5
      %p197 = por %p195, %p196
      %p199 = scmp.ne.s32.totalorder %s184, %s198
      %p200 = scmp.eq.s32.totalorder %s35, 0
      %p201 = por %p199, %p200
      %s203 = sadd.s32 %s202, 1
      %p206 = scmp.eq.s32.totalorder %s29, 5
      %p207 = scmp.ne.s32.totalorder %s202, %s204
      %p208 = scmp.eq.s32.totalorder %s29, 0
      %p209 = por %p207, %p208
      %p210 = scmp.ne.s32.totalorder %s202, %s204
      %p211 = scmp.eq.s32.totalorder %s34, 5
      %p212 = por %p210, %p211
      %p213 = scmp.ne.s32.totalorder %s204, %s205
      %p214 = scmp.eq.s32.totalorder %s34, 0
      %p215 = por %p213, %p214
      %p216 = scmp.ne.s32.totalorder %s204, %s205
      %p217 = scmp.eq.s32.totalorder %s35, 5
      %p218 = por %p216, %p217
      %p220 = scmp.ne.s32.totalorder %s205, %s219
      %p221 = scmp.eq.s32.totalorder %s35, 0
      %p222 = por %p220, %p221
      %s223 = ssub.s32 %s36, %s48
      %p224 = scmp.eq.s32.totalorder %s223, 0
      %s226 = sadd.s32 %s225, 1
      %s227 = scalar_select %p224, %s225, %s226
      %p230 = pneg %p224
      %p231 = scmp.eq.s32.totalorder %s29, 5
      %p232 = por %p230, %p231
      %p233 = scmp.ne.s32.totalorder %s225, %s228
      %p234 = scmp.eq.s32.totalorder %s29, 0
      %p235 = por %p233, %p234
      %p236 = scmp.ne.s32.totalorder %s225, %s228
      %p237 = scmp.eq.s32.totalorder %s34, 5
      %p238 = por %p236, %p237
      %p239 = scmp.ne.s32.totalorder %s228, %s229
      %p240 = scmp.eq.s32.totalorder %s34, 0
      %p241 = por %p239, %p240
      %p242 = scmp.ne.s32.totalorder %s228, %s229
      %p243 = scmp.eq.s32.totalorder %s35, 5
      %p244 = por %p242, %p243
      %p246 = scmp.ne.s32.totalorder %s229, %s245
      %p247 = scmp.eq.s32.totalorder %s35, 0
      %p248 = por %p246, %p247
      %p249 = scmp.le.s32.totalorder 1, %s29
      %p250 = scmp.lt.s32.totalorder %s29, 7
      %p251 = pnand %p249, %p250
      %p252 = pneg %p251
      // Predicated region
      $region9: #{tpu_custom_call.1} parent=5 // pred_check
        _
      $region10: #{tpu_custom_call.1} parent=5 // pred_check_branch
        %254 = sbr.rel (%p251) target = $region12
      $region11: #{tpu_custom_call.1} parent=5 // pred_region
        %s255 = ssub.s32 %s29, 1
        // Predicated region
        $region13: #{tpu_custom_call.1} parent=11 // pred_check
          %p256 = pneg %p194
        $region14: #{tpu_custom_call.1} parent=11 // pred_check_branch
          %258 = sbr.rel (%p256) target = $region16
        $region15: #{tpu_custom_call.1} parent=11 // pred_region
          %s260 = ssub.s32 2048, 2048
          %261 = vsyncadd [#allocation14], %s260
          %s262 = sshll.u32 [#allocation13], 4
          %s263 = int_to_ptr.vmem [resolvable:$true] %s262
          %268 = dma.hbm_to_vmem [thread:$0]  %s5, 2048, %s263, [#allocation14], 128, 128, 8
        $region16: #{tpu_custom_call.1} parent=11 // pred_fallthru
          _
        // Predicated region
        $region17: #{tpu_custom_call.1} parent=11 // pred_check
          %p269 = pneg %p215
        $region18: #{tpu_custom_call.1} parent=11 // pred_check_branch
          %271 = sbr.rel (%p269) target = $region20
        $region19: #{tpu_custom_call.1} parent=11 // pred_region
          %s273 = ssub.s32 16, 16
          %274 = vsyncadd [#allocation14], %s273
          %s276 = sshll.u32 [#allocation15], 4
          %s277 = int_to_ptr.vmem [resolvable:$true] %s276
          %279 = dma.hbm_to_vmem [thread:$0]  %s6, 16, %s277, [#allocation14]
        $region20: #{tpu_custom_call.1} parent=11 // pred_fallthru
          _
      $region12: #{tpu_custom_call.1} parent=5 // pred_fallthru
        _
      %p280 = scmp.lt.s32.totalorder %s29, 6
      // Predicated region
      $region21: #{tpu_custom_call.1} parent=5 // pred_check
        %p281 = pneg %p280
      $region22: #{tpu_custom_call.1} parent=5 // pred_check_branch
        %283 = sbr.rel (%p281) target = $region24
      $region23: #{tpu_custom_call.1} parent=5 // pred_region
        // Predicated region
        $region25: #{tpu_custom_call.1} parent=23 // pred_check
          %p284 = pneg %p79
        $region26: #{tpu_custom_call.1} parent=23 // pred_check_branch
          %286 = sbr.rel (%p284) target = $region28
        $region27: #{tpu_custom_call.1} parent=23 // pred_region
          %s287 = sand.u32 %s69, 1
          %s288 = scalar_lea.sflag [#allocation8], %s287
          %s289 = sand.u32 %s69, 1
          %s290 = smul.addr %s289, 32
          %s291 = scalar_lea.vmem [#allocation7], %s290
          %s292 = sld [smem:[#allocation5 + %s36]]
          %s293 = sld [smem:[#allocation6 + %s36]]
          %s294 = ssub.s32 %s293, 1
          %p295 = scmp.gt.s32.totalorder %s294, 0
          %s296 = scalar_select %p295, %s294, 0
          %s297 = sadd.s32 %s292, %s296
          %s298 = sadd.s32 %s292, %s37
          %p299 = scmp.lt.s32.totalorder %s298, %s297
          %s300 = scalar_select %p299, %s298, %s297
          %s301 = smul.u32 4, %s300
          %s303 = ssub.s32 512, 512
          %304 = vsyncadd %s288, %s303
          %s305 = smul.addr %s301, 128
          %s306 = scalar_lea.hbm %s2, %s305
          %s307 = sshll.u32 %s291, 4
          %s308 = int_to_ptr.vmem [resolvable:$true] %s307
          %313 = dma.hbm_to_vmem [thread:$0]  %s306, 512, %s308, %s288, 128, 128, 8
        $region28: #{tpu_custom_call.1} parent=23 // pred_fallthru
          _
        // Predicated region
        $region29: #{tpu_custom_call.1} parent=23 // pred_check
          %p314 = pneg %p123
        $region30: #{tpu_custom_call.1} parent=23 // pred_check_branch
          %316 = sbr.rel (%p314) target = $region32
        $region31: #{tpu_custom_call.1} parent=23 // pred_region
          %s317 = sand.u32 %s29, 1
          %s318 = scalar_lea.sflag [#allocation11], %s317
          %s319 = sand.u32 %s113, 1
          %s320 = smul.addr %s319, 32
          %s321 = scalar_lea.vmem [#allocation10], %s320
          %s322 = sld [smem:[#allocation5 + %s36]]
          %s323 = sld [smem:[#allocation6 + %s36]]
          %s324 = ssub.s32 %s323, 1
          %p325 = scmp.gt.s32.totalorder %s324, 0
          %s326 = scalar_select %p325, %s324, 0
          %s327 = sadd.s32 %s322, %s326
          %s328 = sadd.s32 %s322, %s37
          %p329 = scmp.lt.s32.totalorder %s328, %s327
          %s330 = scalar_select %p329, %s328, %s327
          %s331 = smul.u32 4, %s330
          %s333 = ssub.s32 512, 512
          %334 = vsyncadd %s318, %s333
          %s335 = smul.addr %s331, 128
          %s336 = scalar_lea.hbm %s3, %s335
          %s337 = sshll.u32 %s321, 4
          %s338 = int_to_ptr.vmem [resolvable:$true] %s337
          %343 = dma.hbm_to_vmem [thread:$0]  %s336, 512, %s338, %s318, 128, 128, 8
        $region32: #{tpu_custom_call.1} parent=23 // pred_fallthru
          _
        // Predicated region
        $region33: #{tpu_custom_call.1} parent=23 // pred_check
          %p344 = pneg %p167
        $region34: #{tpu_custom_call.1} parent=23 // pred_check_branch
          %346 = sbr.rel (%p344) target = $region36
        $region35: #{tpu_custom_call.1} parent=23 // pred_region
          %s347 = sand.u32 %s29, 1
          %s348 = scalar_lea.sflag [#allocation11], %s347
          %s349 = sand.u32 %s157, 1
          %s350 = smul.addr %s349, 32
          %s351 = scalar_lea.vmem [#allocation12], %s350
          %s352 = sld [smem:[#allocation5 + %s36]]
          %s353 = sld [smem:[#allocation6 + %s36]]
          %s354 = ssub.s32 %s353, 1
          %p355 = scmp.gt.s32.totalorder %s354, 0
          %s356 = scalar_select %p355, %s354, 0
          %s357 = sadd.s32 %s352, %s356
          %s358 = sadd.s32 %s352, %s37
          %p359 = scmp.lt.s32.totalorder %s358, %s357
          %s360 = scalar_select %p359, %s358, %s357
          %s361 = smul.u32 4, %s360
          %s363 = ssub.s32 512, 512
          %364 = vsyncadd %s348, %s363
          %s365 = smul.addr %s361, 128
          %s366 = scalar_lea.hbm %s4, %s365
          %s367 = sshll.u32 %s351, 4
          %s368 = int_to_ptr.vmem [resolvable:$true] %s367
          %373 = dma.hbm_to_vmem [thread:$0]  %s366, 512, %s368, %s348, 128, 128, 8
        $region36: #{tpu_custom_call.1} parent=23 // pred_fallthru
          _
      $region24: #{tpu_custom_call.1} parent=5 // pred_fallthru
        _
      %p374 = scmp.le.s32.totalorder 1, %s29
      %p375 = scmp.lt.s32.totalorder %s29, 7
      %p376 = pnand %p374, %p375
      %p377 = pneg %p376
      // Predicated region
      $region37: #{tpu_custom_call.1} parent=5 // pred_check
        _
      $region38: #{tpu_custom_call.1} parent=5 // pred_check_branch
        %379 = sbr.rel (%p376) target = $region40
      $region39: #{tpu_custom_call.1} parent=5 // pred_region
        %s380 = ssub.s32 %s29, 1
        %s381 = sand.u32 %s72, 1
        %s382 = scalar_lea.sflag [#allocation8], %s381
        %s383 = sand.u32 %s72, 1
        %s384 = smul.addr %s383, 32
        %s385 = scalar_lea.vmem [#allocation7], %s384
        // Predicated region
        $region41: #{tpu_custom_call.1} parent=39 // pred_check
          %p386 = pneg %p85
        $region42: #{tpu_custom_call.1} parent=39 // pred_check_branch
          %388 = sbr.rel (%p386) target = $region44
        $region43: #{tpu_custom_call.1} parent=39 // pred_region
          %389 = dma.done %s382, 512
        $region44: #{tpu_custom_call.1} parent=39 // pred_fallthru
          _
        %s390 = sand.u32 %s34, 1
        %s391 = scalar_lea.sflag [#allocation11], %s390
        %s392 = sand.u32 %s116, 1
        %s393 = smul.addr %s392, 32
        %s394 = scalar_lea.vmem [#allocation10], %s393
        // Predicated region
        $region45: #{tpu_custom_call.1} parent=39 // pred_check
          %p395 = pneg %p129
        $region46: #{tpu_custom_call.1} parent=39 // pred_check_branch
          %397 = sbr.rel (%p395) target = $region48
        $region47: #{tpu_custom_call.1} parent=39 // pred_region
          %398 = dma.done %s391, 512
        $region48: #{tpu_custom_call.1} parent=39 // pred_fallthru
          _
        %s399 = sand.u32 %s34, 1
        %s400 = scalar_lea.sflag [#allocation11], %s399
        %s401 = sand.u32 %s160, 1
        %s402 = smul.addr %s401, 32
        %s403 = scalar_lea.vmem [#allocation12], %s402
        // Predicated region
        $region49: #{tpu_custom_call.1} parent=39 // pred_check
          %p404 = pneg %p173
        $region50: #{tpu_custom_call.1} parent=39 // pred_check_branch
          %406 = sbr.rel (%p404) target = $region52
        $region51: #{tpu_custom_call.1} parent=39 // pred_region
          %407 = dma.done %s400, 512
        $region52: #{tpu_custom_call.1} parent=39 // pred_fallthru
          _
        // Predicated region
        $region53: #{tpu_custom_call.1} parent=39 // pred_check
          %p408 = pneg %p194
        $region54: #{tpu_custom_call.1} parent=39 // pred_check_branch
          %410 = sbr.rel (%p408) target = $region56
        $region55: #{tpu_custom_call.1} parent=39 // pred_region
          %411 = dma.done [#allocation14], 2048
        $region56: #{tpu_custom_call.1} parent=39 // pred_fallthru
          _
        // Predicated region
        $region57: #{tpu_custom_call.1} parent=39 // pred_check
          %p412 = pneg %p215
        $region58: #{tpu_custom_call.1} parent=39 // pred_check_branch
          %414 = sbr.rel (%p412) target = $region60
        $region59: #{tpu_custom_call.1} parent=39 // pred_region
          %415 = dma.done [#allocation14], 16
        $region60: #{tpu_custom_call.1} parent=39 // pred_fallthru
          _
        %s416 = sand.u32 %s72, 1
        %s417 = scalar_lea.sflag [#allocation8], %s416
        %s418 = sand.u32 %s72, 1
        %s419 = smul.addr %s418, 32
        %s420 = scalar_lea.vmem [#allocation7], %s419
        %p421 = pneg %p85
        %p422 = pneg %p82
        %s423 = sand.u32 %s34, 1
        %s424 = scalar_lea.sflag [#allocation11], %s423
        %s425 = sand.u32 %s116, 1
        %s426 = smul.addr %s425, 32
        %s427 = scalar_lea.vmem [#allocation10], %s426
        %p428 = pneg %p129
        %p429 = pneg %p126
        %s430 = sand.u32 %s34, 1
        %s431 = scalar_lea.sflag [#allocation11], %s430
        %s432 = sand.u32 %s160, 1
        %s433 = smul.addr %s432, 32
        %s434 = scalar_lea.vmem [#allocation12], %s433
        %p435 = pneg %p173
        %p436 = pneg %p170
        %p437 = pneg %p194
        %p438 = pneg %p191
        %p439 = pneg %p215
        %p440 = pneg %p212
        %p441 = pneg %p241
        %p442 = pneg %p238
        %s443 = sand.u32 %s228, 1
        %s444 = scalar_lea.sflag [#allocation9], %s443
        %s445 = sand.u32 %s228, 1
        %s446 = smul.addr %s445, 8
        %s447 = scalar_lea.vmem [#allocation16], %s446
        %s448 = sld [smem:[#allocation5 + %s38]]
        %s449 = sld [smem:[#allocation6 + %s38]]
        %s450 = ssub.s32 %s449, 1
        %p451 = scmp.gt.s32.totalorder %s450, 0
        %s452 = scalar_select %p451, %s450, 0
        %s453 = sadd.s32 %s448, %s452
        %s454 = sadd.s32 %s448, %s39
        %p455 = scmp.lt.s32.totalorder %s454, %s453
        %s456 = scalar_select %p455, %s454, %s453
        %s457 = smul.u32 4, %s456
        %s458 = sld [smem:[#allocation5 + %s38]]
        %s459 = sld [smem:[#allocation6 + %s38]]
        %s460 = ssub.s32 %s459, 1
        %p461 = scmp.gt.s32.totalorder %s460, 0
        %s462 = scalar_select %p461, %s460, 0
        %s463 = sadd.s32 %s458, %s462
        %s464 = sadd.s32 %s458, %s39
        %p465 = scmp.lt.s32.totalorder %s464, %s463
        %s466 = scalar_select %p465, %s464, %s463
        %s467 = smul.u32 4, %s466
        %s468 = sld [smem:[#allocation5 + %s38]]
        %s469 = sld [smem:[#allocation6 + %s38]]
        %s470 = ssub.s32 %s469, 1
        %p471 = scmp.gt.s32.totalorder %s470, 0
        %s472 = scalar_select %p471, %s470, 0
        %s473 = sadd.s32 %s468, %s472
        %s474 = sadd.s32 %s468, %s39
        %p475 = scmp.lt.s32.totalorder %s474, %s473
        %s476 = scalar_select %p475, %s474, %s473
        %s477 = smul.u32 4, %s476
        %p478 = scmp.eq.s32.totalorder %s39, 0
        // Predicated region
        $region61: #{tpu_custom_call.1} parent=39 // pred_check
          %p479 = pneg %p478
        $region62: #{tpu_custom_call.1} parent=39 // pred_check_branch
          %481 = sbr.rel (%p479) target = $region64
        $region63: #{tpu_custom_call.1} parent=39 // pred_region
          %482 = vst [vmem:[#allocation2] sm:$0xff] 0.0
          %v483 = vlaneseq
          %v484 = vand.u32 %v483, 127
          %s485 = smul.u32 %s38, 8
          %v486 = vstv %s485
          %v487 = vadd.s32 %v484, %v486
          %vm488 = vcmask 57344
          %489 = vst.msk [vmem:[#allocation3] sm:$0x1] %vm488, %v487
        $region64: #{tpu_custom_call.1} parent=39 // pred_fallthru
          _
        %s490 = sld [smem:[#allocation6 + %s38]]
        %p491 = scmp.lt.s32.totalorder %s39, %s490
        // Predicated region
        $region65: #{tpu_custom_call.1} parent=39 // pred_check
          %p492 = pneg %p491
        $region66: #{tpu_custom_call.1} parent=39 // pred_check_branch
          %494 = sbr.rel (%p492) target = $region68
        $region67: #{tpu_custom_call.1} parent=39 // pred_region
          %v495 = vld [vmem:[%s394] sm:$0xff]
          %v496 = vld [vmem:[%s394 + $0x8] sm:$0xff]
          %v497 = vld [vmem:[%s394 + $0x10] sm:$0xff]
          %v498 = vld [vmem:[%s394 + $0x18] sm:$0xff]
          %v499 = vld [vmem:[%s403] sm:$0xff]
          %v500 = vld [vmem:[%s403 + $0x8] sm:$0xff]
          %v501 = vld [vmem:[%s403 + $0x10] sm:$0xff]
          %v502 = vld [vmem:[%s403 + $0x18] sm:$0xff]
          %v503 = vmul.f32 %v495, %v499
          %v504 = vmul.f32 %v496, %v500
          %v505 = vmul.f32 %v497, %v501
          %v506 = vmul.f32 %v498, %v502
          %v507 = vld [vmem:[#allocation3] sm:$0x1]
          %v508 = vlaneseq
          %v509 = vshrl.u32 %v508, 7
          %v510 = vsub.s32 0, %v509
          %v511 = vrot.slane %v507, %v510
          %v512 = vld [vmem:[%s385] sm:$0xff]
          %v513 = vld [vmem:[%s385 + $0x8] sm:$0xff]
          %v514 = vld [vmem:[%s385 + $0x10] sm:$0xff]
          %v515 = vld [vmem:[%s385 + $0x18] sm:$0xff]
          %516 = vset.pattern.permute.xlu0 0
          %517 = vperm.xlu0 %516, %v512
          %v518 = vpop.permute.xlu0 %517
          %519 = vset.pattern.permute.xlu0 0
          %520 = vperm.xlu0 %519, %v513
          %v521 = vpop.permute.xlu0 %520
          %522 = vset.pattern.permute.xlu0 0
          %523 = vperm.xlu0 %522, %v514
          %v524 = vpop.permute.xlu0 %523
          %525 = vset.pattern.permute.xlu0 0
          %526 = vperm.xlu0 %525, %v515
          %v527 = vpop.permute.xlu0 %526
          %vm528 = vcmp.eq.s32.totalorder %v518, %v511
          %vm529 = vcmp.eq.s32.totalorder %v521, %v511
          %vm530 = vcmp.eq.s32.totalorder %v524, %v511
          %vm531 = vcmp.eq.s32.totalorder %v527, %v511
          %v532 = vsel %vm528, 1, 0
          %v533 = vsel %vm529, 1, 0
          %v534 = vsel %vm530, 1, 0
          %v535 = vsel %vm531, 1, 0
          %v536 = vcvt.s32.f32 %v532
          %v537 = vcvt.s32.f32 %v533
          %v538 = vcvt.s32.f32 %v534
          %v539 = vcvt.s32.f32 %v535
          %v540 = vld [vmem:[#allocation2] sm:$0xff]
          %541 = vxpose.xlu0.b32.start [1/16] %v536, 128
          %542 = vxpose.xlu0.b32.cont [2/16] %v537, 128
          %543 = vxpose.xlu0.b32.cont [3/16] %v538, 128
          %544 = vxpose.xlu0.b32.cont [4/16] %v539, 128
          %545 = vxpose.xlu0.b32.cont [5/16] 0.0, 128
          %546 = vxpose.xlu0.b32.cont [6/16] 0.0, 128
          %547 = vxpose.xlu0.b32.cont [7/16] 0.0, 128
          %548 = vxpose.xlu0.b32.cont [8/16] 0.0, 128
          %549 = vxpose.xlu0.b32.cont [9/16] 0.0, 128
          %550 = vxpose.xlu0.b32.cont [10/16] 0.0, 128
          %551 = vxpose.xlu0.b32.cont [11/16] 0.0, 128
          %552 = vxpose.xlu0.b32.cont [12/16] 0.0, 128
          %553 = vxpose.xlu0.b32.cont [13/16] 0.0, 128
          %554 = vxpose.xlu0.b32.cont [14/16] 0.0, 128
          %555 = vxpose.xlu0.b32.cont [15/16] 0.0, 128
          %556 = vxpose.xlu0.b32.end [16/16] 0.0, 128
          %v557 = vpop.trf.xlu0
          %v558 = vpop.trf.xlu0
          %v559 = vpop.trf.xlu0
          %v560 = vpop.trf.xlu0
          %v561 = vpop.trf.xlu0
          %v562 = vpop.trf.xlu0
          %v563 = vpop.trf.xlu0
          %v564 = vpop.trf.xlu0
          %v565 = vpop.trf.xlu0
          %v566 = vpop.trf.xlu0
          %v567 = vpop.trf.xlu0
          %v568 = vpop.trf.xlu0
          %v569 = vpop.trf.xlu0
          %v570 = vpop.trf.xlu0
          %v571 = vpop.trf.xlu0
          %v572 = vpop.trf.xlu0
          %vm573 = vcmask 261120
          %v575 = vsel %vm573, %v557, 0
          %577 = vmatprep.subr.mxu0 0.0
          %578 = vmatpush1.msra.mxu0 %v503
          %579 = vmatprep.subr.mxu0 0.0
          %580 = vmatpush1.msra.mxu0 %v504
          %581 = vmatprep.subr.mxu0 0.0
          %582 = vmatpush1.msra.mxu0 %v505
          %583 = vmatprep.subr.mxu0 0.0
          %584 = vmatpush1.msra.mxu0 %v506
          %585 = vmatprep.subr.mxu0 0.0
          %586 = vmatpush1.msra.mxu0 0.0
          %587 = vmatprep.subr.mxu0 0.0
          %588 = vmatpush1.msra.mxu0 0.0
          %589 = vmatprep.subr.mxu0 0.0
          %590 = vmatpush1.msra.mxu0 0.0
          %591 = vmatprep.subr.mxu0 0.0
          %592 = vmatpush1.msra.mxu0 0.0
          %593 = vmatprep.subr.mxu0 0.0
          %594 = vmatpush1.msra.mxu0 0.0
          %595 = vmatprep.subr.mxu0 0.0
          %596 = vmatpush1.msra.mxu0 0.0
          %597 = vmatprep.subr.mxu0 0.0
          %598 = vmatpush1.msra.mxu0 0.0
          %599 = vmatprep.subr.mxu0 0.0
          %600 = vmatpush1.msra.mxu0 0.0
          %601 = vmatprep.subr.mxu0 0.0
          %602 = vmatpush1.msra.mxu0 0.0
          %603 = vmatprep.subr.mxu0 0.0
          %604 = vmatpush1.msra.mxu0 0.0
          %605 = vmatprep.subr.mxu0 0.0
          %606 = vmatpush1.msra.mxu0 0.0
          %607 = vmatprep.subr.mxu0 0.0
          %608 = vmatpush1.msra.mxu0 0.0
          %609 = vmatprep.subr.mxu0 0.0
          %610 = vmatpush1.msra.mxu0 0.0
          %611 = vmatprep.subr.mxu0 0.0
          %612 = vmatpush1.msra.mxu0 0.0
          %613 = vmatprep.subr.mxu0 0.0
          %614 = vmatpush1.msra.mxu0 0.0
          %615 = vmatprep.subr.mxu0 0.0
          %616 = vmatpush1.msra.mxu0 0.0
          %617 = vmatprep.subr.mxu0 0.0
          %618 = vmatpush1.msra.mxu0 0.0
          %619 = vmatprep.subr.mxu0 0.0
          %620 = vmatpush1.msra.mxu0 0.0
          %621 = vmatprep.subr.mxu0 0.0
          %622 = vmatpush1.msra.mxu0 0.0
          %623 = vmatprep.subr.mxu0 0.0
          %624 = vmatpush1.msra.mxu0 0.0
          %625 = vmatprep.subr.mxu0 0.0
          %626 = vmatpush1.msra.mxu0 0.0
          %627 = vmatprep.subr.mxu0 0.0
          %628 = vmatpush1.msra.mxu0 0.0
          %629 = vmatprep.subr.mxu0 0.0
          %630 = vmatpush1.msra.mxu0 0.0
          %631 = vmatprep.subr.mxu0 0.0
          %632 = vmatpush1.msra.mxu0 0.0
          %633 = vmatprep.subr.mxu0 0.0
          %634 = vmatpush1.msra.mxu0 0.0
          %635 = vmatprep.subr.mxu0 0.0
          %636 = vmatpush1.msra.mxu0 0.0
          %637 = vmatprep.subr.mxu0 0.0
          %638 = vmatpush1.msra.mxu0 0.0
          %639 = vmatprep.subr.mxu0 0.0
          %640 = vmatpush1.msra.mxu0 0.0
          %641 = vmatprep.mubr.f32.mxu0 0.0
          %642 = vmatmul.mubr.f32.gmra.mrb[0].mxu0 %v575
          %v643 = vpop.f32.mrb[0].mxu0
          %v644 = vadd.f32 0.0, %v643
          %v645 = vpop.f32.mrb[0].mxu0
          %646 = vdwg.mxu0
          %v647 = vadd.f32 %v540, %v644
          %648 = vst [vmem:[#allocation2] sm:$0xff] %v647
        $region68: #{tpu_custom_call.1} parent=39 // pred_fallthru
          _
        %p649 = scmp.eq.s32.totalorder %s39, 1
        // Predicated region
        $region69: #{tpu_custom_call.1} parent=39 // pred_check
          %p650 = pneg %p649
        $region70: #{tpu_custom_call.1} parent=39 // pred_check_branch
          %652 = sbr.rel (%p650) target = $region72
        $region71: #{tpu_custom_call.1} parent=39 // pred_region
          %v653 = vld [vmem:[#allocation2] sm:$0xff]
          %v654 = vld [vmem:[#allocation13] sm:$0xff]
          %v655 = vld [vmem:[#allocation13 + $0x8] sm:$0xff]
          %v656 = vld [vmem:[#allocation13 + $0x10] sm:$0xff]
          %v657 = vld [vmem:[#allocation13 + $0x18] sm:$0xff]
          %v658 = vld [vmem:[#allocation13 + $0x20] sm:$0xff]
          %v659 = vld [vmem:[#allocation13 + $0x28] sm:$0xff]
          %v660 = vld [vmem:[#allocation13 + $0x30] sm:$0xff]
          %v661 = vld [vmem:[#allocation13 + $0x38] sm:$0xff]
          %v662 = vld [vmem:[#allocation13 + $0x40] sm:$0xff]
          %v663 = vld [vmem:[#allocation13 + $0x48] sm:$0xff]
          %v664 = vld [vmem:[#allocation13 + $0x50] sm:$0xff]
          %v665 = vld [vmem:[#allocation13 + $0x58] sm:$0xff]
          %v666 = vld [vmem:[#allocation13 + $0x60] sm:$0xff]
          %v667 = vld [vmem:[#allocation13 + $0x68] sm:$0xff]
          %v668 = vld [vmem:[#allocation13 + $0x70] sm:$0xff]
          %v669 = vld [vmem:[#allocation13 + $0x78] sm:$0xff]
          %v670 = vld [vmem:[#allocation15] sm:$0x1]
          %v672 = vlaneseq
          %v673 = vshrl.u32 %v672, 7
          %v674 = vsub.s32 0, %v673
          %v675 = vrot.slane %v670, %v674
          %677 = vmatprep.subr.mxu0 0.0
          %678 = vmatpush1.msra.mxu0 %v654
          %679 = vmatprep.subr.mxu0 0.0
          %680 = vmatpush1.msra.mxu0 %v655
          %681 = vmatprep.subr.mxu0 0.0
          %682 = vmatpush1.msra.mxu0 %v656
          %683 = vmatprep.subr.mxu0 0.0
          %684 = vmatpush1.msra.mxu0 %v657
          %685 = vmatprep.subr.mxu0 0.0
          %686 = vmatpush1.msra.mxu0 %v658
          %687 = vmatprep.subr.mxu0 0.0
          %688 = vmatpush1.msra.mxu0 %v659
          %689 = vmatprep.subr.mxu0 0.0
          %690 = vmatpush1.msra.mxu0 %v660
          %691 = vmatprep.subr.mxu0 0.0
          %692 = vmatpush1.msra.mxu0 %v661
          %693 = vmatprep.subr.mxu0 0.0
          %694 = vmatpush1.msra.mxu0 %v662
          %695 = vmatprep.subr.mxu0 0.0
          %696 = vmatpush1.msra.mxu0 %v663
          %697 = vmatprep.subr.mxu0 0.0
          %698 = vmatpush1.msra.mxu0 %v664
          %699 = vmatprep.subr.mxu0 0.0
          %700 = vmatpush1.msra.mxu0 %v665
          %701 = vmatprep.subr.mxu0 0.0
          %702 = vmatpush1.msra.mxu0 %v666
          %703 = vmatprep.subr.mxu0 0.0
          %704 = vmatpush1.msra.mxu0 %v667
          %705 = vmatprep.subr.mxu0 0.0
          %706 = vmatpush1.msra.mxu0 %v668
          %707 = vmatprep.subr.mxu0 0.0
          %708 = vmatpush1.msra.mxu0 %v669
          %709 = vmatprep.subr.mxu0 0.0
          %710 = vmatpush1.msra.mxu0 0.0
          %711 = vmatprep.subr.mxu0 0.0
          %712 = vmatpush1.msra.mxu0 0.0
          %713 = vmatprep.subr.mxu0 0.0
          %714 = vmatpush1.msra.mxu0 0.0
          %715 = vmatprep.subr.mxu0 0.0
          %716 = vmatpush1.msra.mxu0 0.0
          %717 = vmatprep.subr.mxu0 0.0
          %718 = vmatpush1.msra.mxu0 0.0
          %719 = vmatprep.subr.mxu0 0.0
          %720 = vmatpush1.msra.mxu0 0.0
          %721 = vmatprep.subr.mxu0 0.0
          %722 = vmatpush1.msra.mxu0 0.0
          %723 = vmatprep.subr.mxu0 0.0
          %724 = vmatpush1.msra.mxu0 0.0
          %725 = vmatprep.subr.mxu0 0.0
          %726 = vmatpush1.msra.mxu0 0.0
          %727 = vmatprep.subr.mxu0 0.0
          %728 = vmatpush1.msra.mxu0 0.0
          %729 = vmatprep.subr.mxu0 0.0
          %730 = vmatpush1.msra.mxu0 0.0
          %731 = vmatprep.subr.mxu0 0.0
          %732 = vmatpush1.msra.mxu0 0.0
          %733 = vmatprep.subr.mxu0 0.0
          %734 = vmatpush1.msra.mxu0 0.0
          %735 = vmatprep.subr.mxu0 0.0
          %736 = vmatpush1.msra.mxu0 0.0
          %737 = vmatprep.subr.mxu0 0.0
          %738 = vmatpush1.msra.mxu0 0.0
          %739 = vmatprep.subr.mxu0 0.0
          %740 = vmatpush1.msra.mxu0 0.0
          %741 = vmatprep.mubr.f32.mxu0 0.0
          %742 = vmatmul.mubr.f32.gmra.mrb[0].mxu0 %v653
          %v743 = vpop.f32.mrb[0].mxu0
          %v744 = vadd.f32 %v675, %v743
          %v745 = vpop.f32.mrb[0].mxu0
          %746 = vdwg.mxu0
          %747 = vst [vmem:[%s447] sm:$0xff] %v744
        $region72: #{tpu_custom_call.1} parent=39 // pred_fallthru
          _
        %s748 = sand.u32 %s228, 1
        %s749 = scalar_lea.sflag [#allocation9], %s748
        %s750 = sand.u32 %s228, 1
        %s751 = smul.addr %s750, 8
        %s752 = scalar_lea.vmem [#allocation16], %s751
        // Predicated region
        $region73: #{tpu_custom_call.1} parent=39 // pred_check
          %p753 = pneg %p238
        $region74: #{tpu_custom_call.1} parent=39 // pred_check_branch
          %755 = sbr.rel (%p753) target = $region76
        $region75: #{tpu_custom_call.1} parent=39 // pred_region
          %s757 = ssub.s32 128, 128
          %758 = vsyncadd %s749, %s757
          %s759 = smul.addr %s38, 128
          %s760 = scalar_lea.hbm %s7, %s759
          %s762 = sshll.u32 %s752, 4
          %s763 = int_to_ptr.vmem [resolvable:$true] %s762
          %765 = dma.vmem_to_hbm [thread:$0]  %s763, 128, %s760, %s749
        $region76: #{tpu_custom_call.1} parent=39 // pred_fallthru
          _
      $region40: #{tpu_custom_call.1} parent=5 // pred_fallthru
        _
      %p766 = scmp.le.s32.totalorder 2, %s29
      // Predicated region
      $region77: #{tpu_custom_call.1} parent=5 // pred_check
        %p767 = pneg %p766
      $region78: #{tpu_custom_call.1} parent=5 // pred_check_branch
        %769 = sbr.rel (%p767) target = $region80
      $region79: #{tpu_custom_call.1} parent=5 // pred_region
        %s770 = ssub.s32 %s29, 2
        // Predicated region
        $region81: #{tpu_custom_call.1} parent=79 // pred_check
          %p771 = pneg %p244
        $region82: #{tpu_custom_call.1} parent=79 // pred_check_branch
          %773 = sbr.rel (%p771) target = $region84
        $region83: #{tpu_custom_call.1} parent=79 // pred_region
          %s774 = sand.u32 %s229, 1
          %s775 = scalar_lea.sflag [#allocation9], %s774
          %s776 = sand.u32 %s229, 1
          %s777 = smul.addr %s776, 8
          %s778 = scalar_lea.vmem [#allocation16], %s777
          %779 = dma.done %s775, 128
        $region84: #{tpu_custom_call.1} parent=79 // pred_fallthru
          _
      $region80: #{tpu_custom_call.1} parent=5 // pred_fallthru
        _
    $region6: #{tpu_custom_call.1} parent=1 // loop_footer
      %s33 = sadd.s32 1, %s29
    $region7: #{tpu_custom_call.1} parent=1 // loop_footer_branch
      %28 = sbr.rel target = $region3
    $region8: #{tpu_custom_call.1} parent=1 // loop_exit
      _
    %780 = vsyncpa [#allocation8], 1
    %s781 = scalar_lea.sflag [#allocation8], 1
    %782 = vsyncpa %s781, 1
    %783 = vsyncpa [#allocation11], 1
    %s784 = scalar_lea.sflag [#allocation11], 1
    %785 = vsyncpa %s784, 1
    %786 = vsyncpa [#allocation14], 1
    %787 = vsyncpa [#allocation9], 1
    %s788 = scalar_lea.sflag [#allocation9], 1
    %789 = vsyncpa %s788, 1

</llo_original>
